<compile_context>
chip_gen: v7x
topology: tpu7x:2x2x1
jax: 0.10.0
libtpu: 0.0.40
codegen_flags: <defaults>
</compile_context>

<pallas_src>
import functools
import math

import jax
import jax.numpy as jnp
from jax.experimental import pallas as pl
from jax.experimental.pallas import tpu as pltpu


# ---------------------------------------------------------------------------
# Kernels
# ---------------------------------------------------------------------------
def _nac_gate_kernel(wh_ref, mh_ref, wg_ref):
    """One-shot gate:  W = tanh(W_hat) * sigmoid(M_hat), transposed to (K, N).

    Inputs are (gn, gk) tiles of the (out_dim, in_dim) hats; the output is the
    corresponding (gk, gn) tile of the gated, transposed, matmul-dtype weight.
    sigmoid(m) = 0.5 * (tanh(0.5*m) + 1): one EUP op instead of exp + recip.
    """
    wh = wh_ref[...].astype(jnp.float32)
    mh = mh_ref[...].astype(jnp.float32)
    g = 0.5 * jnp.tanh(wh) * (jnp.tanh(0.5 * mh) + 1.0)
    # Fused transpose (XLU, once per call) -> no wrapper-side `.T`, no
    # per-matmul-step transpose.
    wg_ref[...] = g.T.astype(wg_ref.dtype)


def _nac_matmul_resident_kernel(x_ref, w_ref, o_ref, *, matmul_dtype):
    """Weight-resident path: grid=(batch_tiles,), full (K, N) weight block.

    The weight BlockSpec has a constant index_map, so it is DMA'd once and
    stays in VMEM across batch tiles.  No scratch / no cross-step state, so
    the batch axis is safely marked "parallel" (v7x megacore sharding).
    """
    o_ref[...] = jnp.dot(
        x_ref[...].astype(matmul_dtype),
        w_ref[...],
        preferred_element_type=jnp.float32,
    ).astype(o_ref.dtype)


def _nac_matmul_tiled_kernel(x_ref, w_ref, o_ref, acc_ref, *, matmul_dtype):
    """Tiled fallback: grid=(M,N,K tiles), single weight stream, f32 acc."""
    k = pl.program_id(2)

    @pl.when(k == 0)
    def _():
        acc_ref[...] = jnp.zeros_like(acc_ref)

    acc_ref[...] += jnp.dot(
        x_ref[...].astype(matmul_dtype),
        w_ref[...],
        preferred_element_type=jnp.float32,
    )

    @pl.when(k == pl.num_programs(2) - 1)
    def _():
        o_ref[...] = acc_ref[...].astype(o_ref.dtype)


# ---------------------------------------------------------------------------
# Wrapper helpers
# ---------------------------------------------------------------------------
def _round_up(x, m):
    return ((x + m - 1) // m) * m


def _pad2d(a, rows, cols):
    r, c = a.shape
    if r == rows and c == cols:
        return a
    return jnp.pad(a, ((0, rows - r), (0, cols - c)))


def _pick_gate_tile(dim_pad):
    # dim_pad is always a multiple of 128, so this always divides evenly.
    for t in (256, 128):
        if dim_pad % t == 0:
            return t
    return 128


def _vmem_capacity_bytes():
    """Per-chip VMEM capacity; conservative 64 MiB fallback (v7x per-core)."""
    try:
        info = pltpu.get_tpu_info()
        cap = getattr(info, "vmem_capacity_bytes", None)
        if cap:
            return int(cap)
    except Exception:
        pass
    return 64 * 1024 * 1024


def _compiler_params(dims, needed_bytes, vmem_cap):
    # Explicit scoped-VMEM limit: enough for what we allocate (+ margin),
    # never more than ~90% of physical VMEM for this generation.
    limit = int(min(int(vmem_cap * 0.9),
                    max(int(needed_bytes) + (8 << 20), 32 << 20)))
    return pltpu.CompilerParams(dimension_semantics=dims,
                                vmem_limit_bytes=limit)


# ---------------------------------------------------------------------------
# Forward
# ---------------------------------------------------------------------------
def nac_forward(
    x,
    w_hat,
    m_hat,
    *,
    matmul_dtype=None,
    tm=512,
    tn=512,
    tk=1024,
    weight_resident_budget_bytes=None,
):
    """NAC forward: y = x @ (tanh(W_hat) * sigmoid(M_hat)).T

    x:           (batch, in_dim)
    w_hat/m_hat: (out_dim, in_dim)
    returns:     (batch, out_dim) in x.dtype
    """
    batch, in_dim = x.shape
    out_dim, in_dim_w = w_hat.shape
    assert in_dim == in_dim_w and m_hat.shape == (out_dim, in_dim)

    out_dtype = x.dtype
    if matmul_dtype is None:
        # bf16 MXU operands by default for f32 inputs (gate + accumulation
        # stay f32): native MXU rate + half the weight/operand footprint.
        matmul_dtype = jnp.bfloat16 if x.dtype == jnp.float32 else x.dtype
    matmul_dtype = jnp.dtype(matmul_dtype)

    x_itemsize = jnp.dtype(x.dtype).itemsize
    hat_itemsize = jnp.dtype(w_hat.dtype).itemsize
    w_itemsize = matmul_dtype.itemsize
    o_itemsize = jnp.dtype(out_dtype).itemsize

    # Padded, TPU-aligned problem sizes.  Zero padding is exact for the gate
    # (tanh(0) * sigmoid(0) == 0) and padded rows/cols are sliced off.
    m_pad = _round_up(batch, 8)
    k_pad = _round_up(in_dim, 128)
    n_pad = _round_up(out_dim, 128)

    tm = min(tm, m_pad)
    tn = min(tn, n_pad)
    tk = min(tk, k_pad)
    m_pad = _round_up(m_pad, tm)
    n_pad = _round_up(n_pad, tn)
    k_pad = _round_up(k_pad, tk)

    x_p = _pad2d(x, m_pad, k_pad)
    wh_p = _pad2d(w_hat, n_pad, k_pad)
    mh_p = _pad2d(m_hat, n_pad, k_pad)

    vmem_cap = _vmem_capacity_bytes()
    if weight_resident_budget_bytes is None:
        # ~70% of per-chip VMEM: ~44 MiB on 64 MiB parts (v7x), ~90 MiB on
        # 128 MiB parts (v5e / v6e).
        weight_resident_budget_bytes = int(vmem_cap * 0.70)

    # ----------------- stage 1: one-shot gate (+ transpose + cast) ---------
    gk = _pick_gate_tile(k_pad)
    gn = _pick_gate_tile(n_pad)
    gate_vmem = (2 * 2 * gn * gk * hat_itemsize   # two hat inputs, 2-buffered
                 + 2 * gk * gn * w_itemsize       # output, 2-buffered
                 + gn * gk * 4)                   # transpose temp
    gate_cost = pl.CostEstimate(
        flops=4 * k_pad * n_pad,
        transcendentals=2 * k_pad * n_pad,
        bytes_accessed=(2 * k_pad * n_pad * hat_itemsize
                        + k_pad * n_pad * w_itemsize),
    )
    w_g = pl.pallas_call(
        _nac_gate_kernel,
        out_shape=jax.ShapeDtypeStruct((k_pad, n_pad), matmul_dtype),
        grid_spec=pltpu.PrefetchScalarGridSpec(
            num_scalar_prefetch=0,
            grid=(k_pad // gk, n_pad // gn),
            in_specs=[
                pl.BlockSpec((gn, gk), lambda i, j: (j, i)),
                pl.BlockSpec((gn, gk), lambda i, j: (j, i)),
            ],
            out_specs=pl.BlockSpec((gk, gn), lambda i, j: (i, j)),
        ),
        compiler_params=_compiler_params(("parallel", "parallel"),
                                         gate_vmem, vmem_cap),
        cost_estimate=gate_cost,
    )(wh_p, mh_p)

    # ----------------- stage 2: matmul on the pre-gated weight -------------
    # VMEM for the weight-resident path: double-buffered x and out tiles plus
    # the (conservatively double-buffered) full gated weight.
    resident_bytes = (2 * tm * k_pad * x_itemsize
                      + 2 * k_pad * n_pad * w_itemsize
                      + 2 * tm * n_pad * o_itemsize)

    if resident_bytes <= weight_resident_budget_bytes:
        # -------- weight-resident fast path --------
        cost = pl.CostEstimate(
            flops=2 * m_pad * k_pad * n_pad,
            transcendentals=0,
            bytes_accessed=(m_pad * k_pad * x_itemsize
                            + k_pad * n_pad * w_itemsize
                            + m_pad * n_pad * o_itemsize),
        )
        kernel = functools.partial(_nac_matmul_resident_kernel,
                                   matmul_dtype=matmul_dtype)
        out_p = pl.pallas_call(
            kernel,
            out_shape=jax.ShapeDtypeStruct((m_pad, n_pad), out_dtype),
            grid_spec=pltpu.PrefetchScalarGridSpec(
                num_scalar_prefetch=0,
                grid=(m_pad // tm,),
                in_specs=[
                    pl.BlockSpec((tm, k_pad), lambda i: (i, 0)),
                    # Constant index -> fetched once, stays VMEM-resident.
                    pl.BlockSpec((k_pad, n_pad), lambda i: (0, 0)),
                ],
                out_specs=pl.BlockSpec((tm, n_pad), lambda i: (i, 0)),
            ),
            # No scratch / no cross-step state -> safe for megacore sharding.
            compiler_params=_compiler_params(("parallel",),
                                             resident_bytes, vmem_cap),
            cost_estimate=cost,
        )(x_p, w_g)
    else:
        # -------- general tiled fallback (single weight stream) --------
        tiled_bytes = (2 * tm * tk * x_itemsize
                       + 2 * tk * tn * w_itemsize
                       + 2 * tm * tn * o_itemsize
                       + tm * tn * 4)
        cost = pl.CostEstimate(
            flops=2 * m_pad * k_pad * n_pad,
            transcendentals=0,
            bytes_accessed=(m_pad * k_pad * x_itemsize * (n_pad // tn)
                            + k_pad * n_pad * w_itemsize * (m_pad // tm)
                            + m_pad * n_pad * o_itemsize),
        )
        kernel = functools.partial(_nac_matmul_tiled_kernel,
                                   matmul_dtype=matmul_dtype)
        out_p = pl.pallas_call(
            kernel,
            out_shape=jax.ShapeDtypeStruct((m_pad, n_pad), out_dtype),
            grid_spec=pltpu.PrefetchScalarGridSpec(
                num_scalar_prefetch=0,
                grid=(m_pad // tm, n_pad // tn, k_pad // tk),
                in_specs=[
                    pl.BlockSpec((tm, tk), lambda i, j, k: (i, k)),
                    pl.BlockSpec((tk, tn), lambda i, j, k: (k, j)),
                ],
                out_specs=pl.BlockSpec((tm, tn), lambda i, j, k: (i, j)),
                scratch_shapes=[pltpu.VMEM((tm, tn), jnp.float32)],
            ),
            compiler_params=_compiler_params(
                ("parallel", "parallel", "arbitrary"), tiled_bytes, vmem_cap),
            cost_estimate=cost,
        )(x_p, w_g)

    # Slice away the padding.
    return out_p[:batch, :out_dim]


# ---------------------------------------------------------------------------
# Reference + init helpers
# ---------------------------------------------------------------------------
def nac_reference(x, w_hat, m_hat):
    w = jnp.tanh(w_hat) * jax.nn.sigmoid(m_hat)
    return x @ w.T


def kaiming_uniform(key, shape, fan_in):
    # Mirrors torch.nn.init.kaiming_uniform_ defaults: bound = sqrt(6 / fan_in)
    bound = math.sqrt(6.0 / fan_in)
    return jax.random.uniform(key, shape, jnp.float32, -bound, bound)


# ---------------------------------------------------------------------------
# Self-test
# ---------------------------------------------------------------------------
if __name__ == "__main__":
    key = jax.random.PRNGKey(0)
    k_x, k_w, k_m, k_x2, k_w2, k_m2 = jax.random.split(key, 6)

    # Small shapes consistent with the module: in_dim=32, out_dim=16, batch=8.
    batch, in_dim, out_dim = 8, 32, 16
    x = jax.random.normal(k_x, (batch, in_dim), jnp.float32)
    w_hat = kaiming_uniform(k_w, (out_dim, in_dim), fan_in=in_dim)
    m_hat = kaiming_uniform(k_m, (out_dim, in_dim), fan_in=in_dim)
    y_ref = nac_reference(x, w_hat, m_hat)

    # 1) Default path: weight-resident, bf16 MXU operands, f32 accumulation.
    y = nac_forward(x, w_hat, m_hat)
    jax.block_until_ready(y)
    assert y.shape == (batch, out_dim)
    assert jnp.allclose(y, y_ref, atol=5e-2, rtol=5e-2), "resident bf16 mismatch"

    # 2) Exact f32 MXU operands (tight tolerance).
    y_f32 = nac_forward(x, w_hat, m_hat, matmul_dtype=jnp.float32)
    jax.block_until_ready(y_f32)
    assert jnp.allclose(y_f32, y_ref, atol=1e-4, rtol=1e-4), "resident f32 mismatch"

    # 3) Tiled fallback path, forced by zeroing the resident VMEM budget.
    y_t = nac_forward(x, w_hat, m_hat, matmul_dtype=jnp.float32,
                      weight_resident_budget_bytes=0)
    jax.block_until_ready(y_t)
    assert jnp.allclose(y_t, y_ref, atol=1e-4, rtol=1e-4), "tiled f32 mismatch"

    # 4) Larger shapes exercising multi-step grids on both paths.
    B2, K2, N2 = 512, 256, 256
    x2 = jax.random.normal(k_x2, (B2, K2), jnp.float32)
    w2 = kaiming_uniform(k_w2, (N2, K2), fan_in=K2)
    m2 = kaiming_uniform(k_m2, (N2, K2), fan_in=K2)
    y2_ref = nac_reference(x2, w2, m2)

    # 4a) Resident path with a multi-step (parallel) batch grid.
    y2 = nac_forward(x2, w2, m2, tm=128)
    jax.block_until_ready(y2)
    assert jnp.allclose(y2, y2_ref, atol=5e-2, rtol=5e-2), "large resident mismatch"

    # 4b) Tiled path with multiple M/N/K steps.
    y2_t = nac_forward(x2, w2, m2, tm=128, tn=128, tk=128,
                       weight_resident_budget_bytes=0)
    jax.block_until_ready(y2_t)
    assert jnp.allclose(y2_t, y2_ref, atol=5e-2, rtol=5e-2), "large tiled mismatch"

    print("KERNEL_OK")
</pallas_src>

<mosaic_0001>
module attributes {stable_mosaic.version = 11 : i64} {
  func.func @_nac_gate_kernel(%arg0: i32, %arg1: i32, %arg2: memref<128x128xf32, #tpu.memory_space<vmem>>, %arg3: memref<128x128xf32, #tpu.memory_space<vmem>>, %arg4: memref<128x128xbf16, #tpu.memory_space<vmem>>) attributes {dimension_semantics = [#tpu.dimension_semantics<parallel>, #tpu.dimension_semantics<parallel>], iteration_bounds = array<i64: 1, 1>, scalar_prefetch = 0 : i64, scratch_operands = 0 : i64, tpu.core_type = #tpu.core_type<tc>, window_params = [{transform_indices = @transform_0, window_bounds = array<i64: 128, 128>}, {transform_indices = @transform_1, window_bounds = array<i64: 128, 128>}, {transform_indices = @transform_2, window_bounds = array<i64: 128, 128>}]} {
    %c0 = arith.constant 0 : index
    %c0_0 = arith.constant 0 : index
    %0 = vector.load %arg2[%c0, %c0_0] : memref<128x128xf32, #tpu.memory_space<vmem>>, vector<128x128xf32>
    %c0_1 = arith.constant 0 : index
    %c0_2 = arith.constant 0 : index
    %1 = vector.load %arg3[%c0_1, %c0_2] : memref<128x128xf32, #tpu.memory_space<vmem>>, vector<128x128xf32>
    %2 = math.tanh %0 : vector<128x128xf32>
    %cst = arith.constant 5.000000e-01 : f32
    %3 = vector.broadcast %cst : f32 to vector<128x128xf32>
    %4 = arith.mulf %3, %2 : vector<128x128xf32>
    %cst_3 = arith.constant 5.000000e-01 : f32
    %5 = vector.broadcast %cst_3 : f32 to vector<128x128xf32>
    %6 = arith.mulf %5, %1 : vector<128x128xf32>
    %7 = math.tanh %6 : vector<128x128xf32>
    %cst_4 = arith.constant 1.000000e+00 : f32
    %8 = vector.broadcast %cst_4 : f32 to vector<128x128xf32>
    %9 = arith.addf %7, %8 : vector<128x128xf32>
    %10 = arith.mulf %4, %9 : vector<128x128xf32>
    %11 = tpu.transpose %10, [1, 0] : vector<128x128xf32> -> vector<128x128xf32>
    %12 = arith.truncf %11 : vector<128x128xf32> to vector<128x128xbf16>
    %c0_5 = arith.constant 0 : index
    %c0_6 = arith.constant 0 : index
    %13 = vector.load %arg4[%c0_5, %c0_6] : memref<128x128xbf16, #tpu.memory_space<vmem>>, vector<128x128xbf16>
    tpu.vector_store %arg4[%c0_5, %c0_6], %12 {strides = array<i32>} : memref<128x128xbf16, #tpu.memory_space<vmem>>, vector<128x128xbf16>,
    return
  }
  func.func @transform_0(%arg0: i32, %arg1: i32) -> (i32, i32) {
    %c0_i32 = arith.constant 0 : i32
    return %arg1, %arg0 : i32, i32
  }
  func.func @transform_1(%arg0: i32, %arg1: i32) -> (i32, i32) {
    %c0_i32 = arith.constant 0 : i32
    return %arg1, %arg0 : i32, i32
  }
  func.func @transform_2(%arg0: i32, %arg1: i32) -> (i32, i32) {
    %c0_i32 = arith.constant 0 : i32
    return %arg0, %arg1 : i32, i32
  }
}

</mosaic_0001>

<llo_original>
// kernel: tpu_custom_call.1
$region0: #{tpu_custom_call.1}
  #allocation0 [shape = 'u32[]', space=smem, size = 0x4, offset = 0x4, fixed_abs, tag = 'smem constant byte address 0x4 - core index']
  #allocation1 [shape = 'u32[144,128]{1,0:T(1,128)}', space=vmem, size = 0x12000, scoped, tag = 'internal scratch']
  %s0 = inlined_call_operand.hbm [shape: f32[128,128], index: 0, kind: input, shape index: {}]
  %s1 = inlined_call_operand.hbm [shape: f32[128,128], index: 1, kind: input, shape index: {}]
  %s2 = inlined_call_operand.hbm [shape: bf16[128,128], index: 2, kind: output, shape index: {}]
  %s3 = sld [smem:[#allocation0]]
  $region26: #{tpu_custom_call.1} parent=0
    _
  %s5 = ssub.s32 1, %s3
  %s6 = scalar_select 0, %s5, %s3
  $region1: #{tpu_custom_call.1} parent=0
    #allocation2 [shape = 'u8[65536]{0}', space=vmem, size = 0x10000, scoped, tag = 'input window, operand 0, single buffered']
    #allocation3 [shape = 's32[1]{0}', space=sflag, size = 0x4, scoped, tag = 'scoped memory for tpu_custom_call.1']
    #allocation4 [shape = 's32[1]{0}', space=sflag, size = 0x4, scoped, tag = 'scoped memory for tpu_custom_call.1']
    #allocation5 [shape = 'u8[65536]{0}', space=vmem, size = 0x10000, scoped, tag = 'input window, operand 1, single buffered']
    #allocation6 [shape = 's32[1]{0}', space=sflag, size = 0x4, scoped, tag = 'scoped memory for tpu_custom_call.1']
    #allocation7 [shape = 'u8[32768]{0}', space=vmem, size = 0x8000, scoped, tag = 'output window, operand 0, single buffered']
    %7 = vsyncpa [#allocation3], 0
    %8 = vsyncpa [#allocation6], 0
    %9 = vsyncpa [#allocation4], 0
    // Predicated region
    $region2: #{tpu_custom_call.1} parent=1 // pred_check
      _
    $region3: #{tpu_custom_call.1} parent=1 // pred_check_branch
      %11 = sbr.rel (0) target = $region5
    $region4: #{tpu_custom_call.1} parent=1 // pred_region
      %s13 = ssub.s32 2048, 2048
      %14 = vsyncadd [#allocation3], %s13
      %s15 = sshll.u32 [#allocation2], 4
      %s16 = int_to_ptr.vmem [resolvable:$true] %s15
      %21 = dma.hbm_to_vmem [thread:$0]  %s0, 2048, %s16, [#allocation3], 128, 128, 8
    $region5: #{tpu_custom_call.1} parent=1 // pred_fallthru
      _
    // Predicated region
    $region6: #{tpu_custom_call.1} parent=1 // pred_check
      _
    $region7: #{tpu_custom_call.1} parent=1 // pred_check_branch
      %23 = sbr.rel (0) target = $region9
    $region8: #{tpu_custom_call.1} parent=1 // pred_region
      %s25 = ssub.s32 2048, 2048
      %26 = vsyncadd [#allocation6], %s25
      %s27 = sshll.u32 [#allocation5], 4
      %s28 = int_to_ptr.vmem [resolvable:$true] %s27
      %33 = dma.hbm_to_vmem [thread:$0]  %s1, 2048, %s28, [#allocation6], 128, 128, 8
    $region9: #{tpu_custom_call.1} parent=1 // pred_fallthru
      _
    // Predicated region
    $region10: #{tpu_custom_call.1} parent=1 // pred_check
      _
    $region11: #{tpu_custom_call.1} parent=1 // pred_check_branch
      %35 = sbr.rel (0) target = $region13
    $region12: #{tpu_custom_call.1} parent=1 // pred_region
      %36 = dma.done [#allocation3], 2048
    $region13: #{tpu_custom_call.1} parent=1 // pred_fallthru
      _
    // Predicated region
    $region14: #{tpu_custom_call.1} parent=1 // pred_check
      _
    $region15: #{tpu_custom_call.1} parent=1 // pred_check_branch
      %38 = sbr.rel (0) target = $region17
    $region16: #{tpu_custom_call.1} parent=1 // pred_region
      %39 = dma.done [#allocation6], 2048
    $region17: #{tpu_custom_call.1} parent=1 // pred_fallthru
      _
    %v40 = vld [vmem:[#allocation2] sm:$0xff]
    %v41 = vld [vmem:[#allocation2 + $0x8] sm:$0xff]
    %v42 = vld [vmem:[#allocation2 + $0x10] sm:$0xff]
    %v43 = vld [vmem:[#allocation2 + $0x18] sm:$0xff]
    %v44 = vld [vmem:[#allocation2 + $0x20] sm:$0xff]
    %v45 = vld [vmem:[#allocation2 + $0x28] sm:$0xff]
    %v46 = vld [vmem:[#allocation2 + $0x30] sm:$0xff]
    %v47 = vld [vmem:[#allocation2 + $0x38] sm:$0xff]
    %v48 = vld [vmem:[#allocation2 + $0x40] sm:$0xff]
    %v49 = vld [vmem:[#allocation2 + $0x48] sm:$0xff]
    %v50 = vld [vmem:[#allocation2 + $0x50] sm:$0xff]
    %v51 = vld [vmem:[#allocation2 + $0x58] sm:$0xff]
    %v52 = vld [vmem:[#allocation2 + $0x60] sm:$0xff]
    %v53 = vld [vmem:[#allocation2 + $0x68] sm:$0xff]
    %v54 = vld [vmem:[#allocation2 + $0x70] sm:$0xff]
    %v55 = vld [vmem:[#allocation2 + $0x78] sm:$0xff]
    %v56 = vld [vmem:[#allocation5] sm:$0xff]
    %v57 = vld [vmem:[#allocation5 + $0x8] sm:$0xff]
    %v58 = vld [vmem:[#allocation5 + $0x10] sm:$0xff]
    %v59 = vld [vmem:[#allocation5 + $0x18] sm:$0xff]
    %v60 = vld [vmem:[#allocation5 + $0x20] sm:$0xff]
    %v61 = vld [vmem:[#allocation5 + $0x28] sm:$0xff]
    %v62 = vld [vmem:[#allocation5 + $0x30] sm:$0xff]
    %v63 = vld [vmem:[#allocation5 + $0x38] sm:$0xff]
    %v64 = vld [vmem:[#allocation5 + $0x40] sm:$0xff]
    %v65 = vld [vmem:[#allocation5 + $0x48] sm:$0xff]
    %v66 = vld [vmem:[#allocation5 + $0x50] sm:$0xff]
    %v67 = vld [vmem:[#allocation5 + $0x58] sm:$0xff]
    %v68 = vld [vmem:[#allocation5 + $0x60] sm:$0xff]
    %v69 = vld [vmem:[#allocation5 + $0x68] sm:$0xff]
    %v70 = vld [vmem:[#allocation5 + $0x70] sm:$0xff]
    %v71 = vld [vmem:[#allocation5 + $0x78] sm:$0xff]
    %v72 = vtanh.pop %v40
    %v73 = vtanh.pop %v41
    %v74 = vtanh.pop %v42
    %v75 = vtanh.pop %v43
    %v76 = vtanh.pop %v44
    %v77 = vtanh.pop %v45
    %v78 = vtanh.pop %v46
    %v79 = vtanh.pop %v47
    %v80 = vtanh.pop %v48
    %v81 = vtanh.pop %v49
    %v82 = vtanh.pop %v50
    %v83 = vtanh.pop %v51
    %v84 = vtanh.pop %v52
    %v85 = vtanh.pop %v53
    %v86 = vtanh.pop %v54
    %v87 = vtanh.pop %v55
    %v88 = vmul.f32 %v72, 0.5
    %v89 = vmul.f32 %v73, 0.5
    %v90 = vmul.f32 %v74, 0.5
    %v91 = vmul.f32 %v75, 0.5
    %v92 = vmul.f32 %v76, 0.5
    %v93 = vmul.f32 %v77, 0.5
    %v94 = vmul.f32 %v78, 0.5
    %v95 = vmul.f32 %v79, 0.5
    %v96 = vmul.f32 %v80, 0.5
    %v97 = vmul.f32 %v81, 0.5
    %v98 = vmul.f32 %v82, 0.5
    %v99 = vmul.f32 %v83, 0.5
    %v100 = vmul.f32 %v84, 0.5
    %v101 = vmul.f32 %v85, 0.5
    %v102 = vmul.f32 %v86, 0.5
    %v103 = vmul.f32 %v87, 0.5
    %v104 = vmul.f32 %v56, 0.5
    %v105 = vmul.f32 %v57, 0.5
    %v106 = vmul.f32 %v58, 0.5
    %v107 = vmul.f32 %v59, 0.5
    %v108 = vmul.f32 %v60, 0.5
    %v109 = vmul.f32 %v61, 0.5
    %v110 = vmul.f32 %v62, 0.5
    %v111 = vmul.f32 %v63, 0.5
    %v112 = vmul.f32 %v64, 0.5
    %v113 = vmul.f32 %v65, 0.5
    %v114 = vmul.f32 %v66, 0.5
    %v115 = vmul.f32 %v67, 0.5
    %v116 = vmul.f32 %v68, 0.5
    %v117 = vmul.f32 %v69, 0.5
    %v118 = vmul.f32 %v70, 0.5
    %v119 = vmul.f32 %v71, 0.5
    %v120 = vtanh.pop %v104
    %v121 = vtanh.pop %v105
    %v122 = vtanh.pop %v106
    %v123 = vtanh.pop %v107
    %v124 = vtanh.pop %v108
    %v125 = vtanh.pop %v109
    %v126 = vtanh.pop %v110
    %v127 = vtanh.pop %v111
    %v128 = vtanh.pop %v112
    %v129 = vtanh.pop %v113
    %v130 = vtanh.pop %v114
    %v131 = vtanh.pop %v115
    %v132 = vtanh.pop %v116
    %v133 = vtanh.pop %v117
    %v134 = vtanh.pop %v118
    %v135 = vtanh.pop %v119
    %v136 = vadd.f32 %v120, 1.0
    %v137 = vadd.f32 %v121, 1.0
    %v138 = vadd.f32 %v122, 1.0
    %v139 = vadd.f32 %v123, 1.0
    %v140 = vadd.f32 %v124, 1.0
    %v141 = vadd.f32 %v125, 1.0
    %v142 = vadd.f32 %v126, 1.0
    %v143 = vadd.f32 %v127, 1.0
    %v144 = vadd.f32 %v128, 1.0
    %v145 = vadd.f32 %v129, 1.0
    %v146 = vadd.f32 %v130, 1.0
    %v147 = vadd.f32 %v131, 1.0
    %v148 = vadd.f32 %v132, 1.0
    %v149 = vadd.f32 %v133, 1.0
    %v150 = vadd.f32 %v134, 1.0
    %v151 = vadd.f32 %v135, 1.0
    %v152 = vmul.f32 %v88, %v136
    %v153 = vmul.f32 %v89, %v137
    %v154 = vmul.f32 %v90, %v138
    %v155 = vmul.f32 %v91, %v139
    %v156 = vmul.f32 %v92, %v140
    %v157 = vmul.f32 %v93, %v141
    %v158 = vmul.f32 %v94, %v142
    %v159 = vmul.f32 %v95, %v143
    %v160 = vmul.f32 %v96, %v144
    %v161 = vmul.f32 %v97, %v145
    %v162 = vmul.f32 %v98, %v146
    %v163 = vmul.f32 %v99, %v147
    %v164 = vmul.f32 %v100, %v148
    %v165 = vmul.f32 %v101, %v149
    %v166 = vmul.f32 %v102, %v150
    %v167 = vmul.f32 %v103, %v151
    %168 = vxpose.xlu0.b32.start [1/16] %v152, 128
    %169 = vxpose.xlu0.b32.cont [2/16] %v153, 128
    %170 = vxpose.xlu0.b32.cont [3/16] %v154, 128
    %171 = vxpose.xlu0.b32.cont [4/16] %v155, 128
    %172 = vxpose.xlu0.b32.cont [5/16] %v156, 128
    %173 = vxpose.xlu0.b32.cont [6/16] %v157, 128
    %174 = vxpose.xlu0.b32.cont [7/16] %v158, 128
    %175 = vxpose.xlu0.b32.cont [8/16] %v159, 128
    %176 = vxpose.xlu0.b32.cont [9/16] %v160, 128
    %177 = vxpose.xlu0.b32.cont [10/16] %v161, 128
    %178 = vxpose.xlu0.b32.cont [11/16] %v162, 128
    %179 = vxpose.xlu0.b32.cont [12/16] %v163, 128
    %180 = vxpose.xlu0.b32.cont [13/16] %v164, 128
    %181 = vxpose.xlu0.b32.cont [14/16] %v165, 128
    %182 = vxpose.xlu0.b32.cont [15/16] %v166, 128
    %183 = vxpose.xlu0.b32.end [16/16] %v167, 128
    %v184 = vpop.trf.xlu0
    %v185 = vpop.trf.xlu0
    %v186 = vpop.trf.xlu0
    %v187 = vpop.trf.xlu0
    %v188 = vpop.trf.xlu0
    %v189 = vpop.trf.xlu0
    %v190 = vpop.trf.xlu0
    %v191 = vpop.trf.xlu0
    %v192 = vpop.trf.xlu0
    %v193 = vpop.trf.xlu0
    %v194 = vpop.trf.xlu0
    %v195 = vpop.trf.xlu0
    %v196 = vpop.trf.xlu0
    %v197 = vpop.trf.xlu0
    %v198 = vpop.trf.xlu0
    %v199 = vpop.trf.xlu0
    %v200 = vpack.c.bf16 %v185, %v184
    %v201 = vpack.c.bf16 %v187, %v186
    %v202 = vpack.c.bf16 %v189, %v188
    %v203 = vpack.c.bf16 %v191, %v190
    %v204 = vpack.c.bf16 %v193, %v192
    %v205 = vpack.c.bf16 %v195, %v194
    %v206 = vpack.c.bf16 %v197, %v196
    %v207 = vpack.c.bf16 %v199, %v198
    %v216 = vunpack.c.l.b16 %v200
    %v217 = vunpack.c.h.b16 %v200
    %v218 = vunpack.c.l.b16 %v201
    %v219 = vunpack.c.h.b16 %v201
    %v220 = vunpack.c.l.b16 %v202
    %v221 = vunpack.c.h.b16 %v202
    %v222 = vunpack.c.l.b16 %v203
    %v223 = vunpack.c.h.b16 %v203
    %v224 = vunpack.c.l.b16 %v204
    %v225 = vunpack.c.h.b16 %v204
    %v226 = vunpack.c.l.b16 %v205
    %v227 = vunpack.c.h.b16 %v205
    %v228 = vunpack.c.l.b16 %v206
    %v229 = vunpack.c.h.b16 %v206
    %v230 = vunpack.c.l.b16 %v207
    %v231 = vunpack.c.h.b16 %v207
    %v232 = vpack.c.b16 %v216, %v216
    %v233 = vpack.c.b16 %v217, %v217
    %v234 = vpack.c.b16 %v218, %v218
    %v235 = vpack.c.b16 %v219, %v219
    %v236 = vpack.c.b16 %v220, %v220
    %v237 = vpack.c.b16 %v221, %v221
    %v238 = vpack.c.b16 %v222, %v222
    %v239 = vpack.c.b16 %v223, %v223
    %v240 = vpack.c.b16 %v224, %v224
    %v241 = vpack.c.b16 %v225, %v225
    %v242 = vpack.c.b16 %v226, %v226
    %v243 = vpack.c.b16 %v227, %v227
    %v244 = vpack.c.b16 %v228, %v228
    %v245 = vpack.c.b16 %v229, %v229
    %v246 = vpack.c.b16 %v230, %v230
    %v247 = vpack.c.b16 %v231, %v231
    %264 = vst [vmem:[#allocation7] sm:$0xf] %v232
    %265 = vst [vmem:[#allocation7 + $0x4] sm:$0xf] %v233
    %266 = vst [vmem:[#allocation7 + $0x8] sm:$0xf] %v234
    %267 = vst [vmem:[#allocation7 + $0xc] sm:$0xf] %v235
    %268 = vst [vmem:[#allocation7 + $0x10] sm:$0xf] %v236
    %269 = vst [vmem:[#allocation7 + $0x14] sm:$0xf] %v237
    %270 = vst [vmem:[#allocation7 + $0x18] sm:$0xf] %v238
    %271 = vst [vmem:[#allocation7 + $0x1c] sm:$0xf] %v239
    %272 = vst [vmem:[#allocation7 + $0x20] sm:$0xf] %v240
    %273 = vst [vmem:[#allocation7 + $0x24] sm:$0xf] %v241
    %274 = vst [vmem:[#allocation7 + $0x28] sm:$0xf] %v242
    %275 = vst [vmem:[#allocation7 + $0x2c] sm:$0xf] %v243
    %276 = vst [vmem:[#allocation7 + $0x30] sm:$0xf] %v244
    %277 = vst [vmem:[#allocation7 + $0x34] sm:$0xf] %v245
    %278 = vst [vmem:[#allocation7 + $0x38] sm:$0xf] %v246
    %279 = vst [vmem:[#allocation7 + $0x3c] sm:$0xf] %v247
    // Predicated region
    $region18: #{tpu_custom_call.1} parent=1 // pred_check
      _
    $region19: #{tpu_custom_call.1} parent=1 // pred_check_branch
      %281 = sbr.rel (0) target = $region21
    $region20: #{tpu_custom_call.1} parent=1 // pred_region
      %s283 = ssub.s32 1024, 1024
      %284 = vsyncadd [#allocation4], %s283
      %s285 = sshll.u32 [#allocation7], 4
      %s286 = int_to_ptr.vmem [resolvable:$true] %s285
      %291 = dma.vmem_to_hbm [thread:$0]  %s286, 1024, %s2, [#allocation4], 64, 64, 4
    $region21: #{tpu_custom_call.1} parent=1 // pred_fallthru
      _
    // Predicated region
    $region22: #{tpu_custom_call.1} parent=1 // pred_check
      _
    $region23: #{tpu_custom_call.1} parent=1 // pred_check_branch
      %293 = sbr.rel (0) target = $region25
    $region24: #{tpu_custom_call.1} parent=1 // pred_region
      %294 = dma.done [#allocation4], 1024
    $region25: #{tpu_custom_call.1} parent=1 // pred_fallthru
      _
    %295 = vsyncpa [#allocation3], 1
    %296 = vsyncpa [#allocation6], 1
    %297 = vsyncpa [#allocation4], 1

</llo_original>
